<compile_context>
chip_gen: v5e
topology: v5e:2x2
jax: 0.10.0
libtpu: 0.0.40
codegen_flags: <defaults>
</compile_context>

<pallas_src>
import functools

import jax
import jax.numpy as jnp
from jax.experimental import pallas as pl
from jax.experimental.pallas import tpu as pltpu


def _round_up(x, m):
    return ((x + m - 1) // m) * m


def accuracy_regressor_kernel(x_ref, w1_ref, b1_ref, w2_ref, b2_ref,
                              w3_ref, b3_ref, o_ref):
    # Cast x to bf16 in VMEM (VPU, hidden under DMA), then layer 1:
    # (TM, D) @ (D, H1) on the MXU with f32 accumulation.
    x_bf = x_ref[...].astype(jnp.bfloat16)
    h1 = jnp.dot(x_bf, w1_ref[...], preferred_element_type=jnp.float32)
    h1 = jnp.maximum(h1 + b1_ref[...], 0.0)          # bias + ReLU in f32 (VPU)

    # Layer 2: (TM, H1) @ (H1, H2); feed bf16 into the MXU, accumulate f32.
    h2 = jnp.dot(h1.astype(jnp.bfloat16), w2_ref[...],
                 preferred_element_type=jnp.float32)
    h2 = jnp.maximum(h2 + b2_ref[...], 0.0)

    # Layer 3: H2 -> 1. Contraction of depth 64 with output width 1 is a poor
    # fit for the MXU; do broadcast-multiply (VPU) + cross-lane sum (XLU).
    logit = jnp.sum(h2 * w3_ref[...], axis=-1, keepdims=True) + b3_ref[...]

    # Sigmoid in f32 (exp goes to the EUP slot).
    o_ref[...] = (1.0 / (1.0 + jnp.exp(-logit))).astype(o_ref.dtype)


@functools.partial(jax.jit, static_argnames=("tm",))
def accuracy_regressor(x, w1, b1, w2, b2, w3, b3, *, tm=1024):
    """x: [M, D] -> [M, 1].

    w1: [D, H1], b1: [H1], w2: [H1, H2], b2: [H2], w3: [H2, 1], b3: [1]
    (weights stored as [in, out], i.e. y = x @ W + b, matching nn.Linear).
    """
    M, D = x.shape
    H1 = w1.shape[1]
    H2 = w2.shape[1]

    # Row tile: big when the batch is big, otherwise just the (8-aligned,
    # f32 sublane tile) padded batch. Padded rows compute garbage that is
    # sliced off below.
    TM = tm if M >= tm else _round_up(M, 8)
    grid_m = pl.cdiv(M, TM)
    M_pad = grid_m * TM
    if M_pad != M:
        x = jnp.pad(x, ((0, M_pad - M), (0, 0)))

    x_f32 = x.astype(jnp.float32)                    # cast to bf16 in-kernel
    w1_bf = w1.astype(jnp.bfloat16)
    w2_bf = w2.astype(jnp.bfloat16)
    b1_2d = b1.reshape(1, H1).astype(jnp.float32)
    b2_2d = b2.reshape(1, H2).astype(jnp.float32)
    w3_2d = w3.reshape(1, H2).astype(jnp.float32)    # row vector for lane bcast
    b3_2d = b3.reshape(1, 1).astype(jnp.float32)

    flops = 2 * M_pad * (D * H1 + H1 * H2 + H2)
    bytes_accessed = (4 * M_pad * D               # x (f32)
                      + 4 * M_pad                 # out (f32, width 1)
                      + 2 * (D * H1 + H1 * H2)    # bf16 weights
                      + 4 * (H1 + 2 * H2 + 1))    # f32 biases + last layer

    out = pl.pallas_call(
        accuracy_regressor_kernel,
        out_shape=jax.ShapeDtypeStruct((M_pad, 1), jnp.float32),
        grid=(grid_m,),
        in_specs=[
            pl.BlockSpec((TM, D), lambda i: (i, 0)),    # x rows stream
            pl.BlockSpec((D, H1), lambda i: (0, 0)),    # weights resident
            pl.BlockSpec((1, H1), lambda i: (0, 0)),
            pl.BlockSpec((H1, H2), lambda i: (0, 0)),
            pl.BlockSpec((1, H2), lambda i: (0, 0)),
            pl.BlockSpec((1, H2), lambda i: (0, 0)),
            pl.BlockSpec((1, 1), lambda i: (0, 0)),
        ],
        out_specs=pl.BlockSpec((TM, 1), lambda i: (i, 0)),
        compiler_params=pltpu.CompilerParams(
            dimension_semantics=("parallel",),          # megacore on v7x
            vmem_limit_bytes=32 * 1024 * 1024,          # safe on v5e/v6e/v7x
        ),
        cost_estimate=pl.CostEstimate(
            flops=flops,
            transcendentals=M_pad,                      # one sigmoid per row
            bytes_accessed=bytes_accessed,
        ),
    )(x_f32, w1_bf, b1_2d, w2_bf, b2_2d, w3_2d, b3_2d)

    return out[:M]


def _reference(x, w1, b1, w2, b2, w3, b3):
    # Same precision recipe as the kernel: bf16 MXU inputs, f32 accumulation,
    # f32 elementwise — so the comparison is tight.
    h1 = jnp.dot(x.astype(jnp.bfloat16), w1.astype(jnp.bfloat16),
                 preferred_element_type=jnp.float32) + b1
    h1 = jnp.maximum(h1, 0.0)
    h2 = jnp.dot(h1.astype(jnp.bfloat16), w2.astype(jnp.bfloat16),
                 preferred_element_type=jnp.float32) + b2
    h2 = jnp.maximum(h2, 0.0)
    logit = h2 @ w3 + b3
    return jax.nn.sigmoid(logit)


if __name__ == "__main__":
    # Small shapes consistent with AccuracyRegressor(embedding_dim=64,
    # hidden_dims=[128, 64]).
    batch, emb_dim, h1_dim, h2_dim = 16, 64, 128, 64

    key = jax.random.PRNGKey(0)
    kx, k1, k2, k3, k4, k5, k6 = jax.random.split(key, 7)

    x = jax.random.normal(kx, (batch, emb_dim), dtype=jnp.float32)

    w1 = jax.random.normal(k1, (emb_dim, h1_dim), dtype=jnp.float32) * 0.1
    b1 = jax.random.normal(k2, (h1_dim,), dtype=jnp.float32) * 0.1
    w2 = jax.random.normal(k3, (h1_dim, h2_dim), dtype=jnp.float32) * 0.1
    b2 = jax.random.normal(k4, (h2_dim,), dtype=jnp.float32) * 0.1
    w3 = jax.random.normal(k5, (h2_dim, 1), dtype=jnp.float32) * 0.1
    b3 = jax.random.normal(k6, (1,), dtype=jnp.float32) * 0.1

    out = accuracy_regressor(x, w1, b1, w2, b2, w3, b3)
    jax.block_until_ready(out)

    ref = _reference(x, w1, b1, w2, b2, w3, b3)
    assert out.shape == (batch, 1), out.shape
    assert jnp.all((out >= 0.0) & (out <= 1.0))
    assert jnp.allclose(out, ref, atol=2e-3, rtol=2e-3), (
        float(jnp.max(jnp.abs(out - ref))))

    print("KERNEL_OK")
</pallas_src>

<mosaic_0001>
module attributes {stable_mosaic.version = 11 : i64} {
  func.func @accuracy_regressor_kernel(%arg0: i32, %arg1: memref<16x64xf32, #tpu.memory_space<vmem>>, %arg2: memref<64x128xbf16, #tpu.memory_space<vmem>>, %arg3: memref<1x128xf32, #tpu.memory_space<vmem>>, %arg4: memref<128x64xbf16, #tpu.memory_space<vmem>>, %arg5: memref<1x64xf32, #tpu.memory_space<vmem>>, %arg6: memref<1x64xf32, #tpu.memory_space<vmem>>, %arg7: memref<1x1xf32, #tpu.memory_space<vmem>>, %arg8: memref<16x1xf32, #tpu.memory_space<vmem>>) attributes {dimension_semantics = [#tpu.dimension_semantics<parallel>], iteration_bounds = array<i64: 1>, scalar_prefetch = 0 : i64, scratch_operands = 0 : i64, tpu.core_type = #tpu.core_type<tc>, window_params = [{transform_indices = @transform_0, window_bounds = array<i64: 16, 64>}, {pipeline_mode = #tpu.pipeline_mode<synchronous>, transform_indices = @transform_1, window_bounds = array<i64: 64, 128>}, {pipeline_mode = #tpu.pipeline_mode<synchronous>, transform_indices = @transform_2, window_bounds = array<i64: 1, 128>}, {pipeline_mode = #tpu.pipeline_mode<synchronous>, transform_indices = @transform_3, window_bounds = array<i64: 128, 64>}, {pipeline_mode = #tpu.pipeline_mode<synchronous>, transform_indices = @transform_4, window_bounds = array<i64: 1, 64>}, {pipeline_mode = #tpu.pipeline_mode<synchronous>, transform_indices = @transform_5, window_bounds = array<i64: 1, 64>}, {pipeline_mode = #tpu.pipeline_mode<synchronous>, transform_indices = @transform_6, window_bounds = array<i64: 1, 1>}, {transform_indices = @transform_7, window_bounds = array<i64: 16, 1>}]} {
    %c0 = arith.constant 0 : index
    %c0_0 = arith.constant 0 : index
    %0 = vector.load %arg1[%c0, %c0_0] : memref<16x64xf32, #tpu.memory_space<vmem>>, vector<16x64xf32>
    %1 = arith.truncf %0 : vector<16x64xf32> to vector<16x64xbf16>
    %c0_1 = arith.constant 0 : index
    %c0_2 = arith.constant 0 : index
    %2 = vector.load %arg2[%c0_1, %c0_2] : memref<64x128xbf16, #tpu.memory_space<vmem>>, vector<64x128xbf16>
    %cst = arith.constant dense<0.000000e+00> : vector<16x128xf32>
    %3 = tpu.matmul %1, %2, %cst {dimension_numbers = #tpu.dot_dimension_numbers<[1], [0], [0], [1], [0, 0, 1, 1], [], []>} : vector<16x64xbf16>, vector<64x128xbf16>, vector<16x128xf32> -> vector<16x128xf32>
    %c0_3 = arith.constant 0 : index
    %c0_4 = arith.constant 0 : index
    %4 = vector.load %arg3[%c0_3, %c0_4] : memref<1x128xf32, #tpu.memory_space<vmem>>, vector<1x128xf32>
    %5 = vector.broadcast %4 : vector<1x128xf32> to vector<16x128xf32>
    %6 = arith.addf %3, %5 : vector<16x128xf32>
    %cst_5 = arith.constant 0.000000e+00 : f32
    %7 = vector.broadcast %cst_5 : f32 to vector<16x128xf32>
    %8 = arith.maximumf %6, %7 : vector<16x128xf32>
    %9 = arith.truncf %8 : vector<16x128xf32> to vector<16x128xbf16>
    %c0_6 = arith.constant 0 : index
    %c0_7 = arith.constant 0 : index
    %10 = vector.load %arg4[%c0_6, %c0_7] : memref<128x64xbf16, #tpu.memory_space<vmem>>, vector<128x64xbf16>
    %cst_8 = arith.constant dense<0.000000e+00> : vector<16x64xf32>
    %11 = tpu.matmul %9, %10, %cst_8 {dimension_numbers = #tpu.dot_dimension_numbers<[1], [0], [0], [1], [0, 0, 1, 1], [], []>} : vector<16x128xbf16>, vector<128x64xbf16>, vector<16x64xf32> -> vector<16x64xf32>
    %c0_9 = arith.constant 0 : index
    %c0_10 = arith.constant 0 : index
    %12 = vector.load %arg5[%c0_9, %c0_10] : memref<1x64xf32, #tpu.memory_space<vmem>>, vector<1x64xf32>
    %13 = vector.broadcast %12 : vector<1x64xf32> to vector<16x64xf32>
    %14 = arith.addf %11, %13 : vector<16x64xf32>
    %cst_11 = arith.constant 0.000000e+00 : f32
    %15 = vector.broadcast %cst_11 : f32 to vector<16x64xf32>
    %16 = arith.maximumf %14, %15 : vector<16x64xf32>
    %c0_12 = arith.constant 0 : index
    %c0_13 = arith.constant 0 : index
    %17 = vector.load %arg6[%c0_12, %c0_13] : memref<1x64xf32, #tpu.memory_space<vmem>>, vector<1x64xf32>
    %18 = vector.broadcast %17 : vector<1x64xf32> to vector<16x64xf32>
    %19 = arith.mulf %16, %18 : vector<16x64xf32>
    %cst_14 = arith.constant dense<0.000000e+00> : vector<16xf32>
    %20 = vector.multi_reduction <add>, %19, %cst_14 [1] : vector<16x64xf32> to vector<16xf32>
    %21 = vector.shape_cast %20 : vector<16xf32> to vector<16x1xf32>
    %c0_15 = arith.constant 0 : index
    %c0_16 = arith.constant 0 : index
    %22 = vector.load %arg7[%c0_15, %c0_16] : memref<1x1xf32, #tpu.memory_space<vmem>>, vector<1x1xf32>
    %23 = vector.broadcast %22 : vector<1x1xf32> to vector<16x1xf32>
    %24 = arith.addf %21, %23 : vector<16x1xf32>
    %cst_17 = arith.constant 0.000000e+00 : f32
    %25 = vector.broadcast %cst_17 : f32 to vector<16x1xf32>
    %26 = arith.subf %25, %24 : vector<16x1xf32>
    %27 = math.exp %26 : vector<16x1xf32>
    %cst_18 = arith.constant 1.000000e+00 : f32
    %28 = vector.broadcast %cst_18 : f32 to vector<16x1xf32>
    %29 = arith.addf %28, %27 : vector<16x1xf32>
    %cst_19 = arith.constant 1.000000e+00 : f32
    %30 = vector.broadcast %cst_19 : f32 to vector<16x1xf32>
    %31 = arith.divf %30, %29 : vector<16x1xf32>
    %c0_20 = arith.constant 0 : index
    %c0_21 = arith.constant 0 : index
    %32 = vector.load %arg8[%c0_20, %c0_21] : memref<16x1xf32, #tpu.memory_space<vmem>>, vector<16x1xf32>
    tpu.vector_store %arg8[%c0_20, %c0_21], %31 {strides = array<i32>} : memref<16x1xf32, #tpu.memory_space<vmem>>, vector<16x1xf32>,
    return
  }
  func.func @transform_0(%arg0: i32) -> (i32, i32) {
    %c0_i32 = arith.constant 0 : i32
    %c0_i32_0 = arith.constant 0 : i32
    return %arg0, %c0_i32 : i32, i32
  }
  func.func @transform_1(%arg0: i32) -> (i32, i32) {
    %c0_i32 = arith.constant 0 : i32
    %c0_i32_0 = arith.constant 0 : i32
    %c0_i32_1 = arith.constant 0 : i32
    return %c0_i32, %c0_i32_0 : i32, i32
  }
  func.func @transform_2(%arg0: i32) -> (i32, i32) {
    %c0_i32 = arith.constant 0 : i32
    %c0_i32_0 = arith.constant 0 : i32
    %c0_i32_1 = arith.constant 0 : i32
    return %c0_i32, %c0_i32_0 : i32, i32
  }
  func.func @transform_3(%arg0: i32) -> (i32, i32) {
    %c0_i32 = arith.constant 0 : i32
    %c0_i32_0 = arith.constant 0 : i32
    %c0_i32_1 = arith.constant 0 : i32
    return %c0_i32, %c0_i32_0 : i32, i32
  }
  func.func @transform_4(%arg0: i32) -> (i32, i32) {
    %c0_i32 = arith.constant 0 : i32
    %c0_i32_0 = arith.constant 0 : i32
    %c0_i32_1 = arith.constant 0 : i32
    return %c0_i32, %c0_i32_0 : i32, i32
  }
  func.func @transform_5(%arg0: i32) -> (i32, i32) {
    %c0_i32 = arith.constant 0 : i32
    %c0_i32_0 = arith.constant 0 : i32
    %c0_i32_1 = arith.constant 0 : i32
    return %c0_i32, %c0_i32_0 : i32, i32
  }
  func.func @transform_6(%arg0: i32) -> (i32, i32) {
    %c0_i32 = arith.constant 0 : i32
    %c0_i32_0 = arith.constant 0 : i32
    %c0_i32_1 = arith.constant 0 : i32
    return %c0_i32, %c0_i32_0 : i32, i32
  }
  func.func @transform_7(%arg0: i32) -> (i32, i32) {
    %c0_i32 = arith.constant 0 : i32
    %c0_i32_0 = arith.constant 0 : i32
    return %arg0, %c0_i32 : i32, i32
  }
}

</mosaic_0001>

<llo_original>
// kernel: accuracy_regressor.1
$region0: #{accuracy_regressor.1}
  #allocation0 [shape = 'u32[]', space=smem, size = 0x4, offset = 0x4, fixed_abs, tag = 'smem constant byte address 0x4 - core index']
  #allocation1 [shape = 'u32[72,128]{1,0:T(1,128)}', space=vmem, size = 0x9000, scoped, tag = 'internal scratch']
  #allocation2 [shape = 'f32[1,1]{1,0:T(1,128)S(1)}', space=vmem, size = 0x200, scoped, tag = 'scoped memory for accuracy_regressor.1']
  %s0 = inlined_call_operand.vmem [shape: f32[16,64], index: 0, kind: input, shape index: {}]
  %s1 = inlined_call_operand.vmem [shape: bf16[64,128], index: 1, kind: input, shape index: {}]
  %s2 = inlined_call_operand.vmem [shape: f32[1,128], index: 2, kind: input, shape index: {}]
  %s3 = inlined_call_operand.vmem [shape: bf16[128,64], index: 3, kind: input, shape index: {}]
  %s4 = inlined_call_operand.vmem [shape: f32[1,64], index: 4, kind: input, shape index: {}]
  %s5 = inlined_call_operand.vmem [shape: f32[1,64], index: 5, kind: input, shape index: {}]
  %s6 = inlined_call_operand.<no memory space> [shape: f32[1,1], index: 6, kind: input, shape index: {}]
  %s7 = inlined_call_operand.vmem [shape: f32[16,1], index: 7, kind: output, shape index: {}]
  %s8 = sld [smem:[#allocation0]]
  $region38: #{accuracy_regressor.1} parent=0
    _
  %s10 = ssub.s32 1, %s8
  %s11 = scalar_select 0, %s10, %s8
  %v12 = vstv %s6
  %13 = vst [vmem:[#allocation2] sm:$0x1] %v12
  // Predicated region
  $region2: #{accuracy_regressor.1} parent=0 // pred_check
    _
  $region3: #{accuracy_regressor.1} parent=0 // pred_check_branch
    %15 = sbr.rel (0) target = $region5
  $region4: #{accuracy_regressor.1} parent=0 // pred_region
    _
  $region5: #{accuracy_regressor.1} parent=0 // pred_fallthru
    _
  // Predicated region
  $region6: #{accuracy_regressor.1} parent=0 // pred_check
    _
  $region7: #{accuracy_regressor.1} parent=0 // pred_check_branch
    %17 = sbr.rel (0) target = $region9
  $region8: #{accuracy_regressor.1} parent=0 // pred_region
    _
  $region9: #{accuracy_regressor.1} parent=0 // pred_fallthru
    _
  // Predicated region
  $region10: #{accuracy_regressor.1} parent=0 // pred_check
    _
  $region11: #{accuracy_regressor.1} parent=0 // pred_check_branch
    %19 = sbr.rel (0) target = $region13
  $region12: #{accuracy_regressor.1} parent=0 // pred_region
    _
  $region13: #{accuracy_regressor.1} parent=0 // pred_fallthru
    _
  // Predicated region
  $region14: #{accuracy_regressor.1} parent=0 // pred_check
    _
  $region15: #{accuracy_regressor.1} parent=0 // pred_check_branch
    %21 = sbr.rel (0) target = $region17
  $region16: #{accuracy_regressor.1} parent=0 // pred_region
    _
  $region17: #{accuracy_regressor.1} parent=0 // pred_fallthru
    _
  // Predicated region
  $region18: #{accuracy_regressor.1} parent=0 // pred_check
    _
  $region19: #{accuracy_regressor.1} parent=0 // pred_check_branch
    %23 = sbr.rel (0) target = $region21
  $region20: #{accuracy_regressor.1} parent=0 // pred_region
    _
  $region21: #{accuracy_regressor.1} parent=0 // pred_fallthru
    _
  // Predicated region
  $region22: #{accuracy_regressor.1} parent=0 // pred_check
    _
  $region23: #{accuracy_regressor.1} parent=0 // pred_check_branch
    %25 = sbr.rel (0) target = $region25
  $region24: #{accuracy_regressor.1} parent=0 // pred_region
    _
  $region25: #{accuracy_regressor.1} parent=0 // pred_fallthru
    _
  // Predicated region
  $region26: #{accuracy_regressor.1} parent=0 // pred_check
    _
  $region27: #{accuracy_regressor.1} parent=0 // pred_check_branch
    %27 = sbr.rel (0) target = $region29
  $region28: #{accuracy_regressor.1} parent=0 // pred_region
    _
  $region29: #{accuracy_regressor.1} parent=0 // pred_fallthru
    _
  %v29 = vld [vmem:[%s0] sm:$0xff]
  %v30 = vld [vmem:[%s0 + $0x8] sm:$0xff]
  %v31 = vpack.c.bf16 %v30, %v29
  %v32 = vld [vmem:[%s1] sm:$0xf]
  %v33 = vld [vmem:[%s1 + $0x4] sm:$0xf]
  %v34 = vld [vmem:[%s1 + $0x8] sm:$0xf]
  %v35 = vld [vmem:[%s1 + $0xc] sm:$0xf]
  %v36 = vld [vmem:[%s1 + $0x10] sm:$0xf]
  %v37 = vld [vmem:[%s1 + $0x14] sm:$0xf]
  %v38 = vld [vmem:[%s1 + $0x18] sm:$0xf]
  %v39 = vld [vmem:[%s1 + $0x1c] sm:$0xf]
  %v40 = vld [vmem:[%s2] sm:$0x1]
  %v42 = vperm.slane %v40, 0
  %v52 = vunpack.c.l.b16 %v32
  %v53 = vunpack.c.l.b16 %v33
  %v54 = vunpack.c.l.b16 %v34
  %v55 = vunpack.c.l.b16 %v35
  %v56 = vunpack.c.l.b16 %v36
  %v57 = vunpack.c.l.b16 %v37
  %v58 = vunpack.c.l.b16 %v38
  %v59 = vunpack.c.l.b16 %v39
  %v60 = vpack.c.b16 %v53, %v52
  %v61 = vpack.c.b16 %v55, %v54
  %v62 = vpack.c.b16 %v57, %v56
  %v63 = vpack.c.b16 %v59, %v58
  %vm68 = vcmask 523264
  %v70 = vsel %vm68, %v31, 0
  %72 = vmatpush.bf16.msra.mxu0 0
  %73 = vmatpush.bf16.msra.mxu0 0
  %74 = vmatpush.bf16.msra.mxu0 0
  %75 = vmatpush.bf16.msra.mxu0 0
  %76 = vmatpush.bf16.msra.mxu0 %v63
  %77 = vmatpush.bf16.msra.mxu0 %v62
  %78 = vmatpush.bf16.msra.mxu0 %v61
  %79 = vmatpush.bf16.msra.mxu0 %v60
  %80 = vmatmul.bf16.gmra.mxu0 %v70
  %v81 = vpop.f32.mrf.mxu0
  %v82 = vadd.f32 %v42, %v81
  %v83 = vpop.f32.mrf.mxu0
  %v84 = vadd.f32 %v42, %v83
  %85 = vdwg.mxu0
  %v86 = vmax.f32 %v82, 0.0
  %v87 = vmax.f32 %v84, 0.0
  %v88 = vpack.c.bf16 %v87, %v86
  %v89 = vld [vmem:[%s3] sm:$0xf]
  %v90 = vld [vmem:[%s3 + $0x4] sm:$0xf]
  %v91 = vld [vmem:[%s3 + $0x8] sm:$0xf]
  %v92 = vld [vmem:[%s3 + $0xc] sm:$0xf]
  %v93 = vld [vmem:[%s3 + $0x10] sm:$0xf]
  %v94 = vld [vmem:[%s3 + $0x14] sm:$0xf]
  %v95 = vld [vmem:[%s3 + $0x18] sm:$0xf]
  %v96 = vld [vmem:[%s3 + $0x1c] sm:$0xf]
  %v97 = vld [vmem:[%s3 + $0x20] sm:$0xf]
  %v98 = vld [vmem:[%s3 + $0x24] sm:$0xf]
  %v99 = vld [vmem:[%s3 + $0x28] sm:$0xf]
  %v100 = vld [vmem:[%s3 + $0x2c] sm:$0xf]
  %v101 = vld [vmem:[%s3 + $0x30] sm:$0xf]
  %v102 = vld [vmem:[%s3 + $0x34] sm:$0xf]
  %v103 = vld [vmem:[%s3 + $0x38] sm:$0xf]
  %v104 = vld [vmem:[%s3 + $0x3c] sm:$0xf]
  %v105 = vld [vmem:[%s4] sm:$0x1]
  %v107 = vperm.slane %v105, 0
  %v125 = vunpack.c.l.b16 %v89
  %v126 = vunpack.c.l.b16 %v90
  %v127 = vunpack.c.l.b16 %v91
  %v128 = vunpack.c.l.b16 %v92
  %v129 = vunpack.c.l.b16 %v93
  %v130 = vunpack.c.l.b16 %v94
  %v131 = vunpack.c.l.b16 %v95
  %v132 = vunpack.c.l.b16 %v96
  %v133 = vunpack.c.l.b16 %v97
  %v134 = vunpack.c.l.b16 %v98
  %v135 = vunpack.c.l.b16 %v99
  %v136 = vunpack.c.l.b16 %v100
  %v137 = vunpack.c.l.b16 %v101
  %v138 = vunpack.c.l.b16 %v102
  %v139 = vunpack.c.l.b16 %v103
  %v140 = vunpack.c.l.b16 %v104
  %v141 = vpack.c.b16 %v126, %v125
  %v142 = vpack.c.b16 %v128, %v127
  %v143 = vpack.c.b16 %v130, %v129
  %v144 = vpack.c.b16 %v132, %v131
  %v145 = vpack.c.b16 %v134, %v133
  %v146 = vpack.c.b16 %v136, %v135
  %v147 = vpack.c.b16 %v138, %v137
  %v148 = vpack.c.b16 %v140, %v139
  %157 = vmatpush.bf16.msra.mxu0 %v148
  %158 = vmatpush.bf16.msra.mxu0 %v147
  %159 = vmatpush.bf16.msra.mxu0 %v146
  %160 = vmatpush.bf16.msra.mxu0 %v145
  %161 = vmatpush.bf16.msra.mxu0 %v144
  %162 = vmatpush.bf16.msra.mxu0 %v143
  %163 = vmatpush.bf16.msra.mxu0 %v142
  %164 = vmatpush.bf16.msra.mxu0 %v141
  %165 = vmatmul.bf16.gmra.mxu0 %v88
  %v166 = vpop.f32.mrf.mxu0
  %v167 = vadd.f32 %v107, %v166
  %v168 = vpop.f32.mrf.mxu0
  %v169 = vadd.f32 %v107, %v168
  %170 = vdwg.mxu0
  %v171 = vmax.f32 %v167, 0.0
  %v172 = vmax.f32 %v169, 0.0
  %v173 = vld [vmem:[%s5] sm:$0x1]
  %v175 = vperm.slane %v173, 0
  %v177 = vmul.f32 %v171, %v175
  %v178 = vmul.f32 %v172, %v175
  %v179 = vsel %vm68, %v177, 0.0
  %180 = vadd.xlane.f32.xlu0 %v179
  %v181 = vpop.xlane.xlu0 %180
  %v182 = vsel %vm68, %v178, 0.0
  %183 = vadd.xlane.f32.xlu0 %v182
  %v184 = vpop.xlane.xlu0 %183
  %v185 = vld [vmem:[#allocation2] sm:$0x1]
  %v187 = vperm.slane %v185, 0
  %v189 = vadd.f32 %v181, %v187
  %v190 = vadd.f32 %v184, %v187
  %v191 = vsub.f32 0.0, %v189
  %v192 = vsub.f32 0.0, %v190
  %v193 = vmul.f32 %v191, 1.442695
  %v194 = vpow.pop %v193
  %v195 = vmul.f32 %v192, 1.442695
  %v196 = vpow.pop %v195
  %v197 = vadd.f32 %v194, 1.0
  %v198 = vadd.f32 %v196, 1.0
  %v199 = vrcp.pop %v197
  %v200 = vmul.f32 %v197, %v199
  %v201 = vsub.f32 1.0, %v200
  %v202 = vmul.f32 %v199, %v201
  %v203 = vadd.f32 %v199, %v202
  %vm204 = vweird.f32 %v197
  %vm205 = vweird.f32 %v199
  %vm206 = vmor %vm204, %vm205
  %v207 = vsel %vm206, %v199, %v203
  %v208 = vand.u32 2147483647, %v197
  %vm209 = vcmp.eq.f32.partialorder %v208, 8.507059e+37
  %v210 = vand.u32 %v197, 2147483648
  %v211 = vor.u32 1.1754944e-38, %v210
  %v212 = vsel %vm209, %v211, %v207
  %v213 = vmul.f32 1.0, %v212
  %v214 = vrcp.pop %v198
  %v215 = vmul.f32 %v198, %v214
  %v216 = vsub.f32 1.0, %v215
  %v217 = vmul.f32 %v214, %v216
  %v218 = vadd.f32 %v214, %v217
  %vm219 = vweird.f32 %v198
  %vm220 = vweird.f32 %v214
  %vm221 = vmor %vm219, %vm220
  %v222 = vsel %vm221, %v214, %v218
  %v223 = vand.u32 2147483647, %v198
  %vm224 = vcmp.eq.f32.partialorder %v223, 8.507059e+37
  %v225 = vand.u32 %v198, 2147483648
  %v226 = vor.u32 1.1754944e-38, %v225
  %v227 = vsel %vm224, %v226, %v222
  %v228 = vmul.f32 1.0, %v227
  %vm229 = vcmask 7168
  %230 = vst.msk [vmem:[%s7] sm:$0xff] %vm229, %v213
  %231 = vst.msk [vmem:[%s7 + $0x8] sm:$0xff] %vm229, %v228
  // Predicated region
  $region30: #{accuracy_regressor.1} parent=0 // pred_check
    _
  $region31: #{accuracy_regressor.1} parent=0 // pred_check_branch
    %233 = sbr.rel (0) target = $region33
  $region32: #{accuracy_regressor.1} parent=0 // pred_region
    _
  $region33: #{accuracy_regressor.1} parent=0 // pred_fallthru
    _
  // Predicated region
  $region34: #{accuracy_regressor.1} parent=0 // pred_check
    _
  $region35: #{accuracy_regressor.1} parent=0 // pred_check_branch
    %235 = sbr.rel (0) target = $region37
  $region36: #{accuracy_regressor.1} parent=0 // pred_region
    _
  $region37: #{accuracy_regressor.1} parent=0 // pred_fallthru
    _

</llo_original>
